<compile_context>
chip_gen: v6e
topology: v6e:2x2x1
jax: 0.10.0
libtpu: 0.0.40
codegen_flags: <defaults>
</compile_context>

<pallas_src>
import functools

import jax
import jax.numpy as jnp
from jax.experimental import pallas as pl
from jax.experimental.pallas import tpu as pltpu


def _int_pow(x, p: int):
    """x**p via repeated VPU multiplies (exponentiation by squaring).

    Keeps the literal `x.pow(p)` semantics (including sign for odd p) and
    avoids an exp/log EUP lowering of a float-exponent pow."""
    assert p >= 1
    result = None
    base = x
    while p:
        if p & 1:
            result = base if result is None else result * base
        p >>= 1
        if p:
            base = base * base
    return result


def _normalize_kernel(x_ref, o_ref, *, power: float):
    x_in = x_ref[...]
    x = x_in.astype(jnp.float32)

    p_int = int(power) if (float(power).is_integer() and power >= 1) else None

    # Elementwise x**p — literal reference semantics (no abs).
    if p_int is not None:
        xp = _int_pow(x, p_int)                  # VPU multiplies only
    else:
        # Non-integer p: exp/log pow; NaN for negative x, same as torch.pow
        # with a float exponent (matches the literal reference module).
        xp = x ** jnp.float32(power)

    # dim=1 reduction along the lane axis (XLU slot — free next to VPU work).
    s = jnp.sum(xp, axis=-1, keepdims=True)

    # p-th root: cheap integer-root fast paths; general p is one pow per row.
    if p_int == 1:
        norm = s
    elif p_int == 2:
        norm = jnp.sqrt(s)
    elif p_int == 4:
        norm = jnp.sqrt(jnp.sqrt(s))
    else:
        norm = s ** jnp.float32(1.0 / power)

    # Exact reciprocal on the (rows, 1) column (per-row cost only, invisible
    # under the HBM-bound DMA time), then broadcast multiply.
    inv = 1.0 / (norm + 1e-7)

    if x_in.dtype == jnp.float32:
        out = x * inv
    else:
        # bf16/f16 inputs: scale in the input dtype so the full f32 upcast of
        # the tile does not stay live past the reduction (halves the largest
        # resident intermediate on v6e/v7x; output dtype is input dtype anyway).
        out = x_in * inv.astype(x_in.dtype)

    o_ref[...] = out.astype(o_ref.dtype)


def _round_up(v: int, m: int) -> int:
    return ((v + m - 1) // m) * m


def _vmem_capacity_bytes() -> int:
    try:
        return int(pltpu.get_tpu_info().vmem_capacity_bytes)
    except Exception:
        return 64 << 20  # conservative (v7x-sized) fallback works everywhere


def _pick_tiling(n: int, d: int, itemsize: int) -> tuple[int, int]:
    """Return (block_rows, vmem_limit_bytes) sized from the chip's VMEM.

    Per-step VMEM cost model:
      2x double-buffered (input + output) tiles  -> 4 * rows*d*itemsize
      + f32 intermediates of the live tile        -> 2 * rows*d*4
      + fixed headroom for compiler scratch.
    """
    vmem_cap = _vmem_capacity_bytes()
    headroom = 4 << 20
    budget = (vmem_cap * 3) // 4 - headroom          # never exceed ~75% of VMEM
    per_row = d * (4 * itemsize + 2 * 4)
    rows = max(1, budget // per_row)

    # Sublane packing multiple per dtype (f32: 8, bf16: 16, int8/fp8: 32).
    multiple = 8 * (4 // itemsize) if itemsize in (1, 2, 4) else 8
    rows = max(multiple, (rows // multiple) * multiple)

    # Never allocate more rows than the (padded) batch.
    n_pad = _round_up(n, multiple)
    rows = min(rows, n_pad)

    # v7x: guarantee >=2 (ideally even) grid steps so ("parallel",) semantics
    # can shard rows across both TensorCores. No-op cost on v5e/v6e.
    grid = pl.cdiv(n, rows)
    if grid == 1 and n_pad >= 2 * multiple:
        rows = _round_up(pl.cdiv(n, 2), multiple)
    elif 1 < grid <= 8 and grid % 2 == 1:
        cand = _round_up(pl.cdiv(n, grid + 1), multiple)
        if cand >= multiple and pl.cdiv(n, cand) % 2 == 0:
            rows = cand

    tile_in = rows * d * itemsize
    tile_f32 = rows * d * 4
    vmem_limit = 4 * tile_in + 2 * tile_f32 + headroom
    vmem_limit = max(16 << 20, vmem_limit)           # sane floor (still < 16 MiB scoped default issues avoided by being explicit)
    vmem_limit = min(vmem_limit, vmem_cap - (8 << 20))  # clamp below physical VMEM (v7x)
    return rows, int(vmem_limit)


def _normalize_2d(x: jax.Array, power: float = 2,
                  block_rows: int | None = None) -> jax.Array:
    """L-p normalize over dim 1 of an (N, D) array."""
    assert x.ndim == 2, "expected (N, D) input"
    n, d = x.shape
    itemsize = jnp.dtype(x.dtype).itemsize

    if block_rows is None:
        block_rows, vmem_limit = _pick_tiling(n, d, itemsize)
    else:
        tile_in = block_rows * d * itemsize
        vmem_limit = 4 * tile_in + 2 * block_rows * d * 4 + (4 << 20)
        vmem_limit = max(16 << 20, vmem_limit)
        vmem_limit = min(vmem_limit, _vmem_capacity_bytes() - (8 << 20))

    grid = pl.cdiv(n, block_rows)  # ragged tail handled by Pallas edge masking
    kernel = functools.partial(_normalize_kernel, power=float(power))

    return pl.pallas_call(
        kernel,
        out_shape=jax.ShapeDtypeStruct((n, d), x.dtype),
        grid_spec=pltpu.PrefetchScalarGridSpec(
            num_scalar_prefetch=0,
            grid=(grid,),
            in_specs=[pl.BlockSpec((block_rows, d), lambda i: (i, 0))],
            out_specs=pl.BlockSpec((block_rows, d), lambda i: (i, 0)),
        ),
        compiler_params=pltpu.CompilerParams(
            dimension_semantics=("parallel",),   # shards rows across v7x's 2 TCs
            vmem_limit_bytes=int(vmem_limit),
        ),
    )(x)


def normalize(x: jax.Array, power: float = 2) -> jax.Array:
    """Equivalent of Normalize.forward for any rank: reduce over dim 1."""
    if x.ndim == 2:
        return _normalize_2d(x, power)
    # Move the reduced dim (1) to the lane axis and flatten the rest to rows;
    # the reshapes/transposes are wrapper-level layout plumbing, not compute.
    xm = jnp.moveaxis(x, 1, -1)
    lead = xm.shape[:-1]
    out2 = _normalize_2d(xm.reshape((-1, xm.shape[-1])), power)
    return jnp.moveaxis(out2.reshape(lead + (xm.shape[-1],)), -1, 1)


if __name__ == "__main__":
    key = jax.random.PRNGKey(0)

    def reference(x, p):
        norm = jnp.power(jnp.sum(jnp.power(x, p), axis=1, keepdims=True), 1.0 / p)
        return x / (norm + 1e-7)

    ok = True

    # Test 1: default usage (p=2), (batch, feature) embedding vectors.
    N, D = 16, 256
    x = jax.random.normal(key, (N, D), dtype=jnp.float32)
    out = jax.block_until_ready(normalize(x, power=2))
    ref = reference(x, 2.0)
    ok &= bool(out.shape == x.shape and out.dtype == x.dtype)
    ok &= bool(jnp.max(jnp.abs(out - ref)) < 1e-5)   # exact reciprocal now

    # Test 2: integer-power fast path (p=4) + ragged N (masked tail tile,
    # even-grid split).
    N2, D2 = 20, 256
    x2 = jax.random.normal(jax.random.PRNGKey(1), (N2, D2), dtype=jnp.float32)
    out2 = jax.block_until_ready(normalize(x2, power=4))
    ref2 = reference(x2, 4.0)
    ok &= bool(out2.shape == x2.shape)
    ok &= bool(jnp.max(jnp.abs(out2 - ref2)) < 1e-5)

    # Test 3: 4-D input (N, C, H, W), dim=1 reduction via the general wrapper.
    x3 = jax.random.normal(jax.random.PRNGKey(2), (2, 4, 16, 16), dtype=jnp.float32)
    out3 = jax.block_until_ready(normalize(x3, power=2))
    ref3 = reference(x3, 2.0)
    ok &= bool(out3.shape == x3.shape)
    ok &= bool(jnp.max(jnp.abs(out3 - ref3)) < 1e-5)

    assert ok
    print("KERNEL_OK")
</pallas_src>

<mosaic_0001>
module attributes {stable_mosaic.version = 11 : i64} {
  func.func @_normalize_kernel(%arg0: i32, %arg1: memref<8x256xf32, #tpu.memory_space<vmem>>, %arg2: memref<8x256xf32, #tpu.memory_space<vmem>>) attributes {dimension_semantics = [#tpu.dimension_semantics<parallel>], iteration_bounds = array<i64: 2>, scalar_prefetch = 0 : i64, scratch_operands = 0 : i64, tpu.core_type = #tpu.core_type<tc>, window_params = [{transform_indices = @transform_0, window_bounds = array<i64: 8, 256>}, {transform_indices = @transform_1, window_bounds = array<i64: 8, 256>}]} {
    %c0 = arith.constant 0 : index
    %c0_0 = arith.constant 0 : index
    %0 = vector.load %arg1[%c0, %c0_0] : memref<8x256xf32, #tpu.memory_space<vmem>>, vector<8x256xf32>
    %1 = arith.mulf %0, %0 : vector<8x256xf32>
    %cst = arith.constant dense<0.000000e+00> : vector<8xf32>
    %2 = vector.multi_reduction <add>, %1, %cst [1] : vector<8x256xf32> to vector<8xf32>
    %3 = vector.shape_cast %2 : vector<8xf32> to vector<8x1xf32>
    %4 = math.sqrt %3 : vector<8x1xf32>
    %cst_1 = arith.constant 1.000000e-07 : f32
    %5 = vector.broadcast %cst_1 : f32 to vector<8x1xf32>
    %6 = arith.addf %4, %5 : vector<8x1xf32>
    %cst_2 = arith.constant 1.000000e+00 : f32
    %7 = vector.broadcast %cst_2 : f32 to vector<8x1xf32>
    %8 = arith.divf %7, %6 : vector<8x1xf32>
    %9 = vector.broadcast %8 : vector<8x1xf32> to vector<8x256xf32>
    %10 = arith.mulf %0, %9 : vector<8x256xf32>
    %c0_3 = arith.constant 0 : index
    %c0_4 = arith.constant 0 : index
    %11 = vector.load %arg2[%c0_3, %c0_4] : memref<8x256xf32, #tpu.memory_space<vmem>>, vector<8x256xf32>
    tpu.vector_store %arg2[%c0_3, %c0_4], %10 {strides = array<i32>} : memref<8x256xf32, #tpu.memory_space<vmem>>, vector<8x256xf32>,
    return
  }
  func.func @transform_0(%arg0: i32) -> (i32, i32) {
    %c0_i32 = arith.constant 0 : i32
    %c0_i32_0 = arith.constant 0 : i32
    return %arg0, %c0_i32 : i32, i32
  }
  func.func @transform_1(%arg0: i32) -> (i32, i32) {
    %c0_i32 = arith.constant 0 : i32
    %c0_i32_0 = arith.constant 0 : i32
    return %arg0, %c0_i32 : i32, i32
  }
}

</mosaic_0001>

<llo_original>
// kernel: tpu_custom_call.1
$region0: #{tpu_custom_call.1}
  #allocation0 [shape = 'u32[]', space=smem, size = 0x4, offset = 0x4, fixed_abs, tag = 'smem constant byte address 0x4 - core index']
  #allocation1 [shape = 'u32[144,128]{1,0:T(1,128)}', space=vmem, size = 0x12000, scoped, tag = 'internal scratch']
  %s0 = inlined_call_operand.hbm [shape: f32[16,256], index: 0, kind: input, shape index: {}]
  %s1 = inlined_call_operand.hbm [shape: f32[16,256], index: 1, kind: output, shape index: {}]
  %s2 = sld [smem:[#allocation0]]
  $region41: #{tpu_custom_call.1} parent=0
    _
  %s4 = ssub.s32 1, %s2
  %s5 = scalar_select 0, %s4, %s2
  $region1: #{tpu_custom_call.1} parent=0
    #allocation2 [shape = 'u8[16384]{0}', space=vmem, size = 0x4000, scoped, tag = 'input window, operand 0']
    #allocation3 [shape = 's32[2]{0}', space=sflag, size = 0x8, scoped, tag = 'scoped memory for tpu_custom_call.1']
    #allocation4 [shape = 's32[2]{0}', space=sflag, size = 0x8, scoped, tag = 'scoped memory for tpu_custom_call.1']
    #allocation5 [shape = 'u8[16384]{0}', space=vmem, size = 0x4000, scoped, tag = 'output window, operand 0']
    %6 = vsyncpa [#allocation3], 0
    %s7 = scalar_lea.sflag [#allocation3], 1
    %8 = vsyncpa %s7, 0
    %9 = vsyncpa [#allocation4], 0
    %s10 = scalar_lea.sflag [#allocation4], 1
    %11 = vsyncpa %s10, 0
    loop: start=0, step=1, limit=4
    $region2: #{tpu_custom_call.1} parent=1 // loop_pre_header
      _
    $region3: #{tpu_custom_call.1} parent=1 // loop_header
      %s13 = sphi 0, %s17
      %p14 = scmp.ge.s32.totalorder %s13, 4
      %s23 = sphi 0, %s25
      %s26 = sphi 0, %s23
      %s27 = sphi 0, %s26
      %s43 = sphi 0, %s27
      %s49 = sphi 0, %s51
      %s52 = sphi 0, %s49
      %s53 = sphi 0, %s52
      %s69 = sphi 0, %s53
    $region4: #{tpu_custom_call.1} parent=1 // loop_header_branch
      %16 = sbr.rel (%p14) target = $region8
    $region5: #{tpu_custom_call.1} parent=1 // loop_body
      %s18 = ssub.s32 %s13, 1
      %s19 = ssub.s32 %s13, 2
      %s20 = sadd.s32 %s13, 1
      %s21 = ssub.s32 %s13, %s20
      %p22 = scmp.eq.s32.totalorder %s21, 0
      %s24 = sadd.s32 %s23, 1
      %s25 = scalar_select %p22, %s23, %s24
      %p28 = pneg %p22
      %p29 = scmp.eq.s32.totalorder %s13, 1
      %p30 = por %p28, %p29
      %p31 = scmp.ne.s32.totalorder %s23, %s26
      %p32 = scmp.eq.s32.totalorder %s13, 0
      %p33 = por %p31, %p32
      %p34 = scmp.ne.s32.totalorder %s23, %s26
      %p35 = scmp.eq.s32.totalorder %s18, 1
      %p36 = por %p34, %p35
      %p37 = scmp.ne.s32.totalorder %s26, %s27
      %p38 = scmp.eq.s32.totalorder %s18, 0
      %p39 = por %p37, %p38
      %p40 = scmp.ne.s32.totalorder %s26, %s27
      %p41 = scmp.eq.s32.totalorder %s19, 1
      %p42 = por %p40, %p41
      %p44 = scmp.ne.s32.totalorder %s27, %s43
      %p45 = scmp.eq.s32.totalorder %s19, 0
      %p46 = por %p44, %p45
      %s47 = ssub.s32 %s13, %s20
      %p48 = scmp.eq.s32.totalorder %s47, 0
      %s50 = sadd.s32 %s49, 1
      %s51 = scalar_select %p48, %s49, %s50
      %p54 = pneg %p48
      %p55 = scmp.eq.s32.totalorder %s13, 1
      %p56 = por %p54, %p55
      %p57 = scmp.ne.s32.totalorder %s49, %s52
      %p58 = scmp.eq.s32.totalorder %s13, 0
      %p59 = por %p57, %p58
      %p60 = scmp.ne.s32.totalorder %s49, %s52
      %p61 = scmp.eq.s32.totalorder %s18, 1
      %p62 = por %p60, %p61
      %p63 = scmp.ne.s32.totalorder %s52, %s53
      %p64 = scmp.eq.s32.totalorder %s18, 0
      %p65 = por %p63, %p64
      %p66 = scmp.ne.s32.totalorder %s52, %s53
      %p67 = scmp.eq.s32.totalorder %s19, 1
      %p68 = por %p66, %p67
      %p70 = scmp.ne.s32.totalorder %s53, %s69
      %p71 = scmp.eq.s32.totalorder %s19, 0
      %p72 = por %p70, %p71
      %p73 = scmp.le.s32.totalorder 1, %s13
      %p74 = scmp.lt.s32.totalorder %s13, 3
      %p75 = pnand %p73, %p74
      %p76 = pneg %p75
      // Predicated region
      $region9: #{tpu_custom_call.1} parent=5 // pred_check
        _
      $region10: #{tpu_custom_call.1} parent=5 // pred_check_branch
        %78 = sbr.rel (%p75) target = $region12
      $region11: #{tpu_custom_call.1} parent=5 // pred_region
        %s79 = ssub.s32 %s13, 1
      $region12: #{tpu_custom_call.1} parent=5 // pred_fallthru
        _
      %p80 = scmp.lt.s32.totalorder %s13, 2
      // Predicated region
      $region13: #{tpu_custom_call.1} parent=5 // pred_check
        %p81 = pneg %p80
      $region14: #{tpu_custom_call.1} parent=5 // pred_check_branch
        %83 = sbr.rel (%p81) target = $region16
      $region15: #{tpu_custom_call.1} parent=5 // pred_region
        // Predicated region
        $region17: #{tpu_custom_call.1} parent=15 // pred_check
          %p84 = pneg %p33
        $region18: #{tpu_custom_call.1} parent=15 // pred_check_branch
          %86 = sbr.rel (%p84) target = $region20
        $region19: #{tpu_custom_call.1} parent=15 // pred_region
          %s87 = sand.u32 %s23, 1
          %s88 = scalar_lea.sflag [#allocation3], %s87
          %s89 = sand.u32 %s23, 1
          %s90 = smul.addr %s89, 16
          %s91 = scalar_lea.vmem [#allocation2], %s90
          %s93 = ssub.s32 256, 256
          %94 = vsyncadd %s88, %s93
          %s95 = smul.addr %s13, 2
          %s96 = smul.addr %s95, 128
          %s97 = scalar_lea.hbm %s0, %s96
          %s99 = sshll.u32 %s91, 4
          %s100 = int_to_ptr.vmem [resolvable:$true] %s99
          %102 = dma.hbm_to_vmem [thread:$0]  %s97, 256, %s100, %s88
        $region20: #{tpu_custom_call.1} parent=15 // pred_fallthru
          _
      $region16: #{tpu_custom_call.1} parent=5 // pred_fallthru
        _
      %p103 = scmp.le.s32.totalorder 1, %s13
      %p104 = scmp.lt.s32.totalorder %s13, 3
      %p105 = pnand %p103, %p104
      %p106 = pneg %p105
      // Predicated region
      $region21: #{tpu_custom_call.1} parent=5 // pred_check
        _
      $region22: #{tpu_custom_call.1} parent=5 // pred_check_branch
        %108 = sbr.rel (%p105) target = $region24
      $region23: #{tpu_custom_call.1} parent=5 // pred_region
        %s109 = ssub.s32 %s13, 1
        %s110 = sand.u32 %s26, 1
        %s111 = scalar_lea.sflag [#allocation3], %s110
        %s112 = sand.u32 %s26, 1
        %s113 = smul.addr %s112, 16
        %s114 = scalar_lea.vmem [#allocation2], %s113
        // Predicated region
        $region25: #{tpu_custom_call.1} parent=23 // pred_check
          %p115 = pneg %p39
        $region26: #{tpu_custom_call.1} parent=23 // pred_check_branch
          %117 = sbr.rel (%p115) target = $region28
        $region27: #{tpu_custom_call.1} parent=23 // pred_region
          %118 = dma.done %s111, 256
        $region28: #{tpu_custom_call.1} parent=23 // pred_fallthru
          _
        %s119 = sand.u32 %s26, 1
        %s120 = scalar_lea.sflag [#allocation3], %s119
        %s121 = sand.u32 %s26, 1
        %s122 = smul.addr %s121, 16
        %s123 = scalar_lea.vmem [#allocation2], %s122
        %p124 = pneg %p39
        %p125 = pneg %p36
        %p126 = pneg %p65
        %p127 = pneg %p62
        %s128 = sand.u32 %s52, 1
        %s129 = scalar_lea.sflag [#allocation4], %s128
        %s130 = sand.u32 %s52, 1
        %s131 = smul.addr %s130, 16
        %s132 = scalar_lea.vmem [#allocation5], %s131
        %v133 = vld [vmem:[%s114] sm:$0xff]
        %v134 = vld [vmem:[%s114 + $0x8] sm:$0xff]
        %v135 = vmul.f32 %v133, %v133
        %v136 = vmul.f32 %v134, %v134
        %v137 = vadd.f32 %v135, %v136
        %138 = vadd.xlane.f32.xlu0 %v137
        %v139 = vpop.xlane.xlu0 %138
        %v140 = vrsqrt.pop %v139
        %v141 = vmul.f32 %v139, %v140
        %vm142 = vcmp.eq.f32.partialorder %v139, inf
        %v143 = vsel %vm142, %v139, %v141
        %vm144 = vcmp.eq.f32.partialorder %v139, 0.0
        %v145 = vand.u32 %v139, 2147483648
        %v146 = vsel %vm144, %v145, %v143
        %v147 = vadd.f32 %v146, 1e-07
        %v148 = vrcp.pop %v147
        %v149 = vmul.f32 1.0, %v148
        %v150 = vmul.f32 %v133, %v149
        %v151 = vmul.f32 %v134, %v149
        %152 = vst [vmem:[%s132] sm:$0xff] %v150
        %153 = vst [vmem:[%s132 + $0x8] sm:$0xff] %v151
        %s154 = sand.u32 %s52, 1
        %s155 = scalar_lea.sflag [#allocation4], %s154
        %s156 = sand.u32 %s52, 1
        %s157 = smul.addr %s156, 16
        %s158 = scalar_lea.vmem [#allocation5], %s157
        // Predicated region
        $region29: #{tpu_custom_call.1} parent=23 // pred_check
          %p159 = pneg %p62
        $region30: #{tpu_custom_call.1} parent=23 // pred_check_branch
          %161 = sbr.rel (%p159) target = $region32
        $region31: #{tpu_custom_call.1} parent=23 // pred_region
          %s163 = ssub.s32 256, 256
          %164 = vsyncadd %s155, %s163
          %s165 = smul.addr %s18, 2
          %s166 = smul.addr %s165, 128
          %s167 = scalar_lea.hbm %s1, %s166
          %s169 = sshll.u32 %s158, 4
          %s170 = int_to_ptr.vmem [resolvable:$true] %s169
          %172 = dma.vmem_to_hbm [thread:$0]  %s170, 256, %s167, %s155
        $region32: #{tpu_custom_call.1} parent=23 // pred_fallthru
          _
      $region24: #{tpu_custom_call.1} parent=5 // pred_fallthru
        _
      %p173 = scmp.le.s32.totalorder 2, %s13
      // Predicated region
      $region33: #{tpu_custom_call.1} parent=5 // pred_check
        %p174 = pneg %p173
      $region34: #{tpu_custom_call.1} parent=5 // pred_check_branch
        %176 = sbr.rel (%p174) target = $region36
      $region35: #{tpu_custom_call.1} parent=5 // pred_region
        %s177 = ssub.s32 %s13, 2
        // Predicated region
        $region37: #{tpu_custom_call.1} parent=35 // pred_check
          %p178 = pneg %p68
        $region38: #{tpu_custom_call.1} parent=35 // pred_check_branch
          %180 = sbr.rel (%p178) target = $region40
        $region39: #{tpu_custom_call.1} parent=35 // pred_region
          %s181 = sand.u32 %s53, 1
          %s182 = scalar_lea.sflag [#allocation4], %s181
          %s183 = sand.u32 %s53, 1
          %s184 = smul.addr %s183, 16
          %s185 = scalar_lea.vmem [#allocation5], %s184
          %186 = dma.done %s182, 256
        $region40: #{tpu_custom_call.1} parent=35 // pred_fallthru
          _
      $region36: #{tpu_custom_call.1} parent=5 // pred_fallthru
        _
    $region6: #{tpu_custom_call.1} parent=1 // loop_footer
      %s17 = sadd.s32 1, %s13
    $region7: #{tpu_custom_call.1} parent=1 // loop_footer_branch
      %12 = sbr.rel target = $region3
    $region8: #{tpu_custom_call.1} parent=1 // loop_exit
      _
    %187 = vsyncpa [#allocation3], 1
    %s188 = scalar_lea.sflag [#allocation3], 1
    %189 = vsyncpa %s188, 1
    %190 = vsyncpa [#allocation4], 1
    %s191 = scalar_lea.sflag [#allocation4], 1
    %192 = vsyncpa %s191, 1

</llo_original>
